<compile_context>
chip_gen: v7x
topology: tpu7x:2x2x1
jax: 0.10.0
libtpu: 0.0.40
codegen_flags: <defaults>
</compile_context>

<pallas_src>
import functools

import jax
import jax.numpy as jnp
from jax.experimental import pallas as pl
from jax.experimental.pallas import tpu as pltpu

LANE = 128
SMALL_N_MAX = 512          # n <= this -> single fused, grid-less kernel
DEFAULT_TILE_M = 256       # row tile of A (output rows) for the tiled path
DEFAULT_TILE_K = 512       # contraction tile over N for the tiled path


def _round_up(x, m):
    return (x + m - 1) // m * m


def _pad2d(x, rows, cols):
    return jnp.zeros((rows, cols), x.dtype).at[: x.shape[0], : x.shape[1]].set(x)


def _vmem_limit_bytes():
    """Per-generation scoped-VMEM limit (~65% of capacity), safe fallback."""
    try:
        cap = int(pltpu.get_tpu_info().vmem_capacity_bytes)
        return int(cap * 0.65)
    except Exception:
        return 40 << 20  # fits v7x (64 MiB) as well as v5e/v6e (128 MiB)


def _log_softmax_masked(z, valid_cols):
    """Row-wise log_softmax over the first `valid_cols` lanes (rest masked)."""
    col = jax.lax.broadcasted_iota(jnp.int32, z.shape, 1)
    z = jnp.where(col < valid_cols, z, -1e30)
    m = jnp.max(z, axis=1, keepdims=True)
    s = z - m
    lse = jnp.log(jnp.sum(jnp.exp(s), axis=1, keepdims=True))
    return s - lse


# ---------------------------------------------------------------------------
# Small-graph fast path: both GCN layers fused in a single grid-less kernel.
# Everything (A, X, W1, b1, W2, b2) is resident in VMEM.
# ---------------------------------------------------------------------------
def gcn_fused_small_kernel(a_ref, x_ref, w1_ref, b1_ref, w2_ref, b2_ref, o_ref,
                           *, valid_cols):
    a = a_ref[...]                                                    # bf16
    # Layer 1: relu(A @ (X @ W1) + b1)
    xw1 = jnp.dot(x_ref[...], w1_ref[...], preferred_element_type=jnp.float32)
    h1 = jnp.dot(a, xw1.astype(a.dtype), preferred_element_type=jnp.float32)
    h1 = jnp.maximum(h1 + b1_ref[...], 0.0).astype(a.dtype)
    # F.dropout(p=0.5, training=False) -> identity.
    # Layer 2: log_softmax(A @ (H1 @ W2) + b2)
    hw2 = jnp.dot(h1, w2_ref[...], preferred_element_type=jnp.float32)
    z = jnp.dot(a, hw2.astype(a.dtype), preferred_element_type=jnp.float32)
    z = z + b2_ref[...]
    o_ref[...] = _log_softmax_masked(z, valid_cols).astype(o_ref.dtype)


def gcn_fused_small(a_p, x_p, w1_p, b1_p, w2_p, b2_p, *, valid_cols, vmem_limit):
    n_pad = a_p.shape[0]
    c_pad = w2_p.shape[1]
    kernel = functools.partial(gcn_fused_small_kernel, valid_cols=valid_cols)
    return pl.pallas_call(
        kernel,
        out_shape=jax.ShapeDtypeStruct((n_pad, c_pad), jnp.float32),
        compiler_params=pltpu.CompilerParams(vmem_limit_bytes=vmem_limit),
    )(a_p, x_p, w1_p, b1_p, w2_p, b2_p)


# ---------------------------------------------------------------------------
# Large-graph path: one fused kernel per layer.
#   grid = (row_tiles, k_tiles)    (reduction axis last, "arbitrary")
#   acc[i] += A[i, k] @ X[k, :]    (f32 VMEM accumulator, N-independent VMEM)
#   at last k:  out[i] = act(bf16(acc) @ W + b)
# (A @ X) @ W == A @ (X @ W), so the standalone X@W matmul kernel is gone.
# ---------------------------------------------------------------------------
def gcn_layer_kernel(a_ref, x_ref, w_ref, b_ref, o_ref, acc_ref,
                     *, activation, valid_cols):
    k = pl.program_id(1)

    @pl.when(k == 0)
    def _():
        acc_ref[...] = jnp.zeros_like(acc_ref)

    acc_ref[...] += jnp.dot(a_ref[...], x_ref[...],
                            preferred_element_type=jnp.float32)

    @pl.when(k == pl.num_programs(1) - 1)
    def _():
        ax = acc_ref[...].astype(w_ref.dtype)
        z = jnp.dot(ax, w_ref[...], preferred_element_type=jnp.float32)
        z = z + b_ref[...]
        if activation == "relu":
            o_ref[...] = jnp.maximum(z, 0.0).astype(o_ref.dtype)
        else:  # log_softmax with padded lanes masked out of the lse
            o_ref[...] = _log_softmax_masked(z, valid_cols).astype(o_ref.dtype)


def gcn_layer(a_p, x_p, w_p, b_p, *, tile_m, tile_k, activation, valid_cols,
              out_dtype, vmem_limit):
    n_pad = a_p.shape[0]
    f_pad = x_p.shape[1]
    c_pad = w_p.shape[1]
    assert n_pad % tile_m == 0, (n_pad, tile_m)
    assert n_pad % tile_k == 0, (n_pad, tile_k)
    grid = (n_pad // tile_m, n_pad // tile_k)
    kernel = functools.partial(gcn_layer_kernel, activation=activation,
                               valid_cols=valid_cols)
    return pl.pallas_call(
        kernel,
        out_shape=jax.ShapeDtypeStruct((n_pad, c_pad), out_dtype),
        grid_spec=pltpu.PrefetchScalarGridSpec(
            num_scalar_prefetch=0,
            grid=grid,
            in_specs=[
                pl.BlockSpec((tile_m, tile_k), lambda i, k: (i, k)),  # A tile
                pl.BlockSpec((tile_k, f_pad), lambda i, k: (k, 0)),   # X k-tile
                pl.BlockSpec((f_pad, c_pad), lambda i, k: (0, 0)),    # W resident
                pl.BlockSpec((1, c_pad), lambda i, k: (0, 0)),        # bias
            ],
            out_specs=pl.BlockSpec((tile_m, c_pad), lambda i, k: (i, 0)),
            scratch_shapes=[pltpu.VMEM((tile_m, f_pad), jnp.float32)],
        ),
        compiler_params=pltpu.CompilerParams(
            dimension_semantics=("parallel", "arbitrary"),
            vmem_limit_bytes=vmem_limit,
        ),
    )(a_p, x_p, w_p, b_p)


# ---------------------------------------------------------------------------
# Forward factory: pad + bf16-cast the input-invariant adjacency / weights
# ONCE, then return a jitted forward(x).
# ---------------------------------------------------------------------------
def make_gcn_forward(a_norm, w1, b1, w2, b2, *,
                     tile_m=DEFAULT_TILE_M, tile_k=DEFAULT_TILE_K):
    n = a_norm.shape[0]
    f_in = w1.shape[0]
    h1_dim = w1.shape[1]
    h2_dim = w2.shape[1]

    small = n <= SMALL_N_MAX
    align = LANE if small else max(tile_m, tile_k)
    n_pad = _round_up(n, align)
    f_pad = _round_up(f_in, LANE)
    h1_pad = _round_up(h1_dim, LANE)
    h2_pad = _round_up(h2_dim, LANE)
    vmem_limit = _vmem_limit_bytes()

    # bf16 MXU operands; biases stay f32 (added after the f32 accumulation).
    a_p = _pad2d(a_norm, n_pad, n_pad).astype(jnp.bfloat16)
    w1_p = _pad2d(w1, f_pad, h1_pad).astype(jnp.bfloat16)
    w2_p = _pad2d(w2, h1_pad, h2_pad).astype(jnp.bfloat16)
    b1_p = _pad2d(b1.reshape(1, -1).astype(jnp.float32), 1, h1_pad)
    b2_p = _pad2d(b2.reshape(1, -1).astype(jnp.float32), 1, h2_pad)

    @jax.jit
    def forward(x):
        x_p = _pad2d(x, n_pad, f_pad).astype(jnp.bfloat16)
        if small:
            out = gcn_fused_small(a_p, x_p, w1_p, b1_p, w2_p, b2_p,
                                  valid_cols=h2_dim, vmem_limit=vmem_limit)
        else:
            h1 = gcn_layer(a_p, x_p, w1_p, b1_p,
                           tile_m=tile_m, tile_k=tile_k,
                           activation="relu", valid_cols=h1_pad,
                           out_dtype=jnp.bfloat16, vmem_limit=vmem_limit)
            # F.dropout(p=0.5, training=False) -> identity.
            out = gcn_layer(a_p, h1, w2_p, b2_p,
                            tile_m=tile_m, tile_k=tile_k,
                            activation="log_softmax", valid_cols=h2_dim,
                            out_dtype=jnp.float32, vmem_limit=vmem_limit)
        return out[:n, :h2_dim]

    return forward


def gcn_normalized_adjacency(edge_index, num_nodes):
    """Dense D^-1/2 (A + I) D^-1/2 matching torch_geometric's gcn_norm.

    edge_index: (2, E) int32 [source, target]; message flows source -> target,
    so A_hat[target, source] += 1. Duplicate edges are summed (PyG semantics).
    """
    src = edge_index[0]
    tgt = edge_index[1]
    a = jnp.zeros((num_nodes, num_nodes), jnp.float32).at[tgt, src].add(1.0)
    a = a + jnp.eye(num_nodes, dtype=jnp.float32)  # self loops
    deg = jnp.sum(a, axis=1)
    d_inv_sqrt = jax.lax.rsqrt(deg)
    return d_inv_sqrt[:, None] * a * d_inv_sqrt[None, :]


def _reference(a_norm, x, w1, b1, w2, b2):
    h = jnp.maximum(a_norm @ (x @ w1) + b1, 0.0)
    return jax.nn.log_softmax(a_norm @ (h @ w2) + b2, axis=1)


def _make_glorot(key, fan_in, fan_out):
    lim = jnp.sqrt(6.0 / (fan_in + fan_out))
    return jax.random.uniform(key, (fan_in, fan_out), jnp.float32, -1.0, 1.0) * lim


if __name__ == "__main__":
    key = jax.random.PRNGKey(0)
    F_IN = 16         # predict_set.num_node_features (synthetic)
    H1, H2 = 40, 24   # GCNConv(F_IN, 40), GCNConv(40, 24)

    k_x, k_e, k_w1, k_w2, k_x2, k_e2 = jax.random.split(key, 6)
    w1 = _make_glorot(k_w1, F_IN, H1)
    b1 = jnp.zeros((1, H1), jnp.float32)
    w2 = _make_glorot(k_w2, H1, H2)
    b2 = jnp.zeros((1, H2), jnp.float32)

    # --- deployed-size graph: single fused grid-less kernel path ------------
    N, E = 16, 40
    x = jax.random.normal(k_x, (N, F_IN), jnp.float32)
    edge_index = jax.random.randint(k_e, (2, E), 0, N, jnp.int32)
    a_norm = gcn_normalized_adjacency(edge_index, N)

    fwd = make_gcn_forward(a_norm, w1, b1, w2, b2)
    out = fwd(x)
    jax.block_until_ready(out)
    assert out.shape == (N, H2)

    ref = _reference(a_norm, x, w1, b1, w2, b2)
    assert bool(jnp.all(jnp.isfinite(out)))
    assert float(jnp.max(jnp.abs(out - ref))) < 0.25  # bf16 MXU operands

    # --- larger graph: exercises the fused, K-tiled per-layer path ----------
    N_BIG, E_BIG = 1024, 4096
    x_big = jax.random.normal(k_x2, (N_BIG, F_IN), jnp.float32)
    edge_big = jax.random.randint(k_e2, (2, E_BIG), 0, N_BIG, jnp.int32)
    a_big = gcn_normalized_adjacency(edge_big, N_BIG)

    fwd_big = make_gcn_forward(a_big, w1, b1, w2, b2)
    out_big = fwd_big(x_big)
    jax.block_until_ready(out_big)
    assert out_big.shape == (N_BIG, H2)

    ref_big = _reference(a_big, x_big, w1, b1, w2, b2)
    assert bool(jnp.all(jnp.isfinite(out_big)))
    assert float(jnp.max(jnp.abs(out_big - ref_big))) < 0.5  # loose: bf16 A/X

    print("KERNEL_OK")
</pallas_src>

<mosaic_0001>
module attributes {stable_mosaic.version = 11 : i64} {
  func.func @gcn_fused_small_kernel(%arg0: memref<128x128xbf16, #tpu.memory_space<vmem>>, %arg1: memref<128x128xbf16, #tpu.memory_space<vmem>>, %arg2: memref<128x128xbf16, #tpu.memory_space<vmem>>, %arg3: memref<1x128xf32, #tpu.memory_space<vmem>>, %arg4: memref<128x128xbf16, #tpu.memory_space<vmem>>, %arg5: memref<1x128xf32, #tpu.memory_space<vmem>>, %arg6: memref<128x128xf32, #tpu.memory_space<vmem>>) attributes {dimension_semantics = [], scalar_prefetch = 0 : i64, scratch_operands = 0 : i64, tpu.core_type = #tpu.core_type<tc>} {
    %c0 = arith.constant 0 : index
    %c0_0 = arith.constant 0 : index
    %0 = vector.load %arg0[%c0, %c0_0] : memref<128x128xbf16, #tpu.memory_space<vmem>>, vector<128x128xbf16>
    %c0_1 = arith.constant 0 : index
    %c0_2 = arith.constant 0 : index
    %1 = vector.load %arg1[%c0_1, %c0_2] : memref<128x128xbf16, #tpu.memory_space<vmem>>, vector<128x128xbf16>
    %c0_3 = arith.constant 0 : index
    %c0_4 = arith.constant 0 : index
    %2 = vector.load %arg2[%c0_3, %c0_4] : memref<128x128xbf16, #tpu.memory_space<vmem>>, vector<128x128xbf16>
    %cst = arith.constant dense<0.000000e+00> : vector<128x128xf32>
    %3 = tpu.matmul %1, %2, %cst {dimension_numbers = #tpu.dot_dimension_numbers<[1], [0], [0], [1], [0, 0, 1, 1], [], []>} : vector<128x128xbf16>, vector<128x128xbf16>, vector<128x128xf32> -> vector<128x128xf32>
    %4 = arith.truncf %3 : vector<128x128xf32> to vector<128x128xbf16>
    %cst_5 = arith.constant dense<0.000000e+00> : vector<128x128xf32>
    %5 = tpu.matmul %0, %4, %cst_5 {dimension_numbers = #tpu.dot_dimension_numbers<[1], [0], [0], [1], [0, 0, 1, 1], [], []>} : vector<128x128xbf16>, vector<128x128xbf16>, vector<128x128xf32> -> vector<128x128xf32>
    %c0_6 = arith.constant 0 : index
    %c0_7 = arith.constant 0 : index
    %6 = vector.load %arg3[%c0_6, %c0_7] : memref<1x128xf32, #tpu.memory_space<vmem>>, vector<1x128xf32>
    %7 = vector.broadcast %6 : vector<1x128xf32> to vector<128x128xf32>
    %8 = arith.addf %5, %7 : vector<128x128xf32>
    %cst_8 = arith.constant 0.000000e+00 : f32
    %9 = vector.broadcast %cst_8 : f32 to vector<128x128xf32>
    %10 = arith.maximumf %8, %9 : vector<128x128xf32>
    %11 = arith.truncf %10 : vector<128x128xf32> to vector<128x128xbf16>
    %c0_9 = arith.constant 0 : index
    %c0_10 = arith.constant 0 : index
    %12 = vector.load %arg4[%c0_9, %c0_10] : memref<128x128xbf16, #tpu.memory_space<vmem>>, vector<128x128xbf16>
    %cst_11 = arith.constant dense<0.000000e+00> : vector<128x128xf32>
    %13 = tpu.matmul %11, %12, %cst_11 {dimension_numbers = #tpu.dot_dimension_numbers<[1], [0], [0], [1], [0, 0, 1, 1], [], []>} : vector<128x128xbf16>, vector<128x128xbf16>, vector<128x128xf32> -> vector<128x128xf32>
    %14 = arith.truncf %13 : vector<128x128xf32> to vector<128x128xbf16>
    %cst_12 = arith.constant dense<0.000000e+00> : vector<128x128xf32>
    %15 = tpu.matmul %0, %14, %cst_12 {dimension_numbers = #tpu.dot_dimension_numbers<[1], [0], [0], [1], [0, 0, 1, 1], [], []>} : vector<128x128xbf16>, vector<128x128xbf16>, vector<128x128xf32> -> vector<128x128xf32>
    %c0_13 = arith.constant 0 : index
    %c0_14 = arith.constant 0 : index
    %16 = vector.load %arg5[%c0_13, %c0_14] : memref<1x128xf32, #tpu.memory_space<vmem>>, vector<1x128xf32>
    %17 = vector.broadcast %16 : vector<1x128xf32> to vector<128x128xf32>
    %18 = arith.addf %15, %17 : vector<128x128xf32>
    %19 = tpu.iota {dimensions = array<i32: 1>} : vector<128x128xi32>
    %c24_i32 = arith.constant 24 : i32
    %20 = vector.broadcast %c24_i32 : i32 to vector<128x128xi32>
    %21 = arith.cmpi slt, %19, %20 : vector<128x128xi32>
    %cst_15 = arith.constant -1.000000e+30 : f32
    %22 = vector.broadcast %cst_15 : f32 to vector<128x128xf32>
    %23 = arith.select %21, %18, %22 : vector<128x128xi1>, vector<128x128xf32>
    %cst_16 = arith.constant dense<0xFF800000> : vector<128xf32>
    %24 = vector.multi_reduction <maximumf>, %23, %cst_16 [1] : vector<128x128xf32> to vector<128xf32>
    %25 = vector.shape_cast %24 : vector<128xf32> to vector<128x1xf32>
    %26 = vector.broadcast %25 : vector<128x1xf32> to vector<128x128xf32>
    %27 = arith.subf %23, %26 : vector<128x128xf32>
    %28 = math.exp %27 : vector<128x128xf32>
    %cst_17 = arith.constant dense<0.000000e+00> : vector<128xf32>
    %29 = vector.multi_reduction <add>, %28, %cst_17 [1] : vector<128x128xf32> to vector<128xf32>
    %30 = vector.shape_cast %29 : vector<128xf32> to vector<128x1xf32>
    %31 = math.log %30 : vector<128x1xf32>
    %32 = vector.broadcast %31 : vector<128x1xf32> to vector<128x128xf32>
    %33 = arith.subf %27, %32 : vector<128x128xf32>
    %c0_18 = arith.constant 0 : index
    %c0_19 = arith.constant 0 : index
    %34 = vector.load %arg6[%c0_18, %c0_19] : memref<128x128xf32, #tpu.memory_space<vmem>>, vector<128x128xf32>
    tpu.vector_store %arg6[%c0_18, %c0_19], %33 {strides = array<i32>} : memref<128x128xf32, #tpu.memory_space<vmem>>, vector<128x128xf32>,
    return
  }
}

</mosaic_0001>

<llo_original>
// kernel: forward.1
$region0: #{forward.1}
  #allocation0 [shape = 'u32[]', space=smem, size = 0x4, offset = 0x4, fixed_abs, tag = 'smem constant byte address 0x4 - core index']
  #allocation1 [shape = 'u32[144,128]{1,0:T(1,128)}', space=vmem, size = 0x12000, scoped, tag = 'internal scratch']
  %s0 = inlined_call_operand.hbm [shape: bf16[128,128], index: 0, kind: input, shape index: {}]
  %s1 = inlined_call_operand.vmem [shape: bf16[128,128], index: 1, kind: input, shape index: {}]
  %s2 = inlined_call_operand.hbm [shape: bf16[128,128], index: 2, kind: input, shape index: {}]
  %s3 = inlined_call_operand.vmem [shape: f32[1,128], index: 3, kind: input, shape index: {}, may-alias: {3,5}]
  %s4 = inlined_call_operand.vmem [shape: bf16[128,128], index: 4, kind: input, shape index: {}]
  %s5 = inlined_call_operand.vmem [shape: f32[1,128], index: 5, kind: input, shape index: {}, may-alias: {3,5}]
  %s6 = inlined_call_operand.vmem [shape: f32[128,128], index: 6, kind: output, shape index: {}]
  %s7 = sld [smem:[#allocation0]]
  $region42: #{forward.1} parent=0
    _
  %s9 = ssub.s32 1, %s7
  %s10 = scalar_select 0, %s9, %s7
  $region1: #{forward.1} parent=0
    #allocation2 [shape = 'u8[32768]{0}', space=vmem, size = 0x8000, scoped, tag = 'input window, operand 0, single buffered']
    #allocation3 [shape = 's32[1]{0}', space=sflag, size = 0x4, scoped, tag = 'scoped memory for forward.1']
    #allocation4 [shape = 'u8[32768]{0}', space=vmem, size = 0x8000, scoped, tag = 'input window, operand 2, single buffered']
    #allocation5 [shape = 's32[1]{0}', space=sflag, size = 0x4, scoped, tag = 'scoped memory for forward.1']
    %11 = vsyncpa [#allocation3], 0
    %12 = vsyncpa [#allocation5], 0
    // Predicated region
    $region2: #{forward.1} parent=1 // pred_check
      _
    $region3: #{forward.1} parent=1 // pred_check_branch
      %14 = sbr.rel (0) target = $region5
    $region4: #{forward.1} parent=1 // pred_region
      %s16 = ssub.s32 1024, 1024
      %17 = vsyncadd [#allocation3], %s16
      %s18 = sshll.u32 [#allocation2], 4
      %s19 = int_to_ptr.vmem [resolvable:$true] %s18
      %24 = dma.hbm_to_vmem [thread:$0]  %s0, 1024, %s19, [#allocation3], 64, 64, 4
    $region5: #{forward.1} parent=1 // pred_fallthru
      _
    // Predicated region
    $region6: #{forward.1} parent=1 // pred_check
      _
    $region7: #{forward.1} parent=1 // pred_check_branch
      %26 = sbr.rel (0) target = $region9
    $region8: #{forward.1} parent=1 // pred_region
      _
    $region9: #{forward.1} parent=1 // pred_fallthru
      _
    // Predicated region
    $region10: #{forward.1} parent=1 // pred_check
      _
    $region11: #{forward.1} parent=1 // pred_check_branch
      %28 = sbr.rel (0) target = $region13
    $region12: #{forward.1} parent=1 // pred_region
      %s30 = ssub.s32 1024, 1024
      %31 = vsyncadd [#allocation5], %s30
      %s32 = sshll.u32 [#allocation4], 4
      %s33 = int_to_ptr.vmem [resolvable:$true] %s32
      %38 = dma.hbm_to_vmem [thread:$0]  %s2, 1024, %s33, [#allocation5], 64, 64, 4
    $region13: #{forward.1} parent=1 // pred_fallthru
      _
    // Predicated region
    $region14: #{forward.1} parent=1 // pred_check
      _
    $region15: #{forward.1} parent=1 // pred_check_branch
      %40 = sbr.rel (0) target = $region17
    $region16: #{forward.1} parent=1 // pred_region
      _
    $region17: #{forward.1} parent=1 // pred_fallthru
      _
    // Predicated region
    $region18: #{forward.1} parent=1 // pred_check
      _
    $region19: #{forward.1} parent=1 // pred_check_branch
      %42 = sbr.rel (0) target = $region21
    $region20: #{forward.1} parent=1 // pred_region
      _
    $region21: #{forward.1} parent=1 // pred_fallthru
      _
    // Predicated region
    $region22: #{forward.1} parent=1 // pred_check
      _
    $region23: #{forward.1} parent=1 // pred_check_branch
      %44 = sbr.rel (0) target = $region25
    $region24: #{forward.1} parent=1 // pred_region
      _
    $region25: #{forward.1} parent=1 // pred_fallthru
      _
    // Predicated region
    $region26: #{forward.1} parent=1 // pred_check
      _
    $region27: #{forward.1} parent=1 // pred_check_branch
      %46 = sbr.rel (0) target = $region29
    $region28: #{forward.1} parent=1 // pred_region
      %47 = dma.done [#allocation3], 1024
    $region29: #{forward.1} parent=1 // pred_fallthru
      _
    // Predicated region
    $region30: #{forward.1} parent=1 // pred_check
      _
    $region31: #{forward.1} parent=1 // pred_check_branch
      %49 = sbr.rel (0) target = $region33
    $region32: #{forward.1} parent=1 // pred_region
      %50 = dma.done [#allocation5], 1024
    $region33: #{forward.1} parent=1 // pred_fallthru
      _
    %v52 = vld [vmem:[#allocation2] sm:$0xf]
    %v53 = vld [vmem:[#allocation2 + $0x4] sm:$0xf]
    %v54 = vld [vmem:[#allocation2 + $0x8] sm:$0xf]
    %v55 = vld [vmem:[#allocation2 + $0xc] sm:$0xf]
    %v56 = vld [vmem:[#allocation2 + $0x10] sm:$0xf]
    %v57 = vld [vmem:[#allocation2 + $0x14] sm:$0xf]
    %v58 = vld [vmem:[#allocation2 + $0x18] sm:$0xf]
    %v59 = vld [vmem:[#allocation2 + $0x1c] sm:$0xf]
    %v60 = vld [vmem:[#allocation2 + $0x20] sm:$0xf]
    %v61 = vld [vmem:[#allocation2 + $0x24] sm:$0xf]
    %v62 = vld [vmem:[#allocation2 + $0x28] sm:$0xf]
    %v63 = vld [vmem:[#allocation2 + $0x2c] sm:$0xf]
    %v64 = vld [vmem:[#allocation2 + $0x30] sm:$0xf]
    %v65 = vld [vmem:[#allocation2 + $0x34] sm:$0xf]
    %v66 = vld [vmem:[#allocation2 + $0x38] sm:$0xf]
    %v67 = vld [vmem:[#allocation2 + $0x3c] sm:$0xf]
    %v68 = vld [vmem:[%s1] sm:$0xf]
    %v69 = vld [vmem:[%s1 + $0x4] sm:$0xf]
    %v70 = vld [vmem:[%s1 + $0x8] sm:$0xf]
    %v71 = vld [vmem:[%s1 + $0xc] sm:$0xf]
    %v72 = vld [vmem:[%s1 + $0x10] sm:$0xf]
    %v73 = vld [vmem:[%s1 + $0x14] sm:$0xf]
    %v74 = vld [vmem:[%s1 + $0x18] sm:$0xf]
    %v75 = vld [vmem:[%s1 + $0x1c] sm:$0xf]
    %v76 = vld [vmem:[%s1 + $0x20] sm:$0xf]
    %v77 = vld [vmem:[%s1 + $0x24] sm:$0xf]
    %v78 = vld [vmem:[%s1 + $0x28] sm:$0xf]
    %v79 = vld [vmem:[%s1 + $0x2c] sm:$0xf]
    %v80 = vld [vmem:[%s1 + $0x30] sm:$0xf]
    %v81 = vld [vmem:[%s1 + $0x34] sm:$0xf]
    %v82 = vld [vmem:[%s1 + $0x38] sm:$0xf]
    %v83 = vld [vmem:[%s1 + $0x3c] sm:$0xf]
    %v84 = vld [vmem:[#allocation4] sm:$0xf]
    %v85 = vld [vmem:[#allocation4 + $0x4] sm:$0xf]
    %v86 = vld [vmem:[#allocation4 + $0x8] sm:$0xf]
    %v87 = vld [vmem:[#allocation4 + $0xc] sm:$0xf]
    %v88 = vld [vmem:[#allocation4 + $0x10] sm:$0xf]
    %v89 = vld [vmem:[#allocation4 + $0x14] sm:$0xf]
    %v90 = vld [vmem:[#allocation4 + $0x18] sm:$0xf]
    %v91 = vld [vmem:[#allocation4 + $0x1c] sm:$0xf]
    %v92 = vld [vmem:[#allocation4 + $0x20] sm:$0xf]
    %v93 = vld [vmem:[#allocation4 + $0x24] sm:$0xf]
    %v94 = vld [vmem:[#allocation4 + $0x28] sm:$0xf]
    %v95 = vld [vmem:[#allocation4 + $0x2c] sm:$0xf]
    %v96 = vld [vmem:[#allocation4 + $0x30] sm:$0xf]
    %v97 = vld [vmem:[#allocation4 + $0x34] sm:$0xf]
    %v98 = vld [vmem:[#allocation4 + $0x38] sm:$0xf]
    %v99 = vld [vmem:[#allocation4 + $0x3c] sm:$0xf]
    %v116 = vunpack.c.l.b16 %v68
    %v117 = vunpack.c.l.b16 %v69
    %v118 = vunpack.c.l.b16 %v70
    %v119 = vunpack.c.l.b16 %v71
    %v120 = vunpack.c.l.b16 %v72
    %v121 = vunpack.c.l.b16 %v73
    %v122 = vunpack.c.l.b16 %v74
    %v123 = vunpack.c.l.b16 %v75
    %v124 = vunpack.c.l.b16 %v76
    %v125 = vunpack.c.l.b16 %v77
    %v126 = vunpack.c.l.b16 %v78
    %v127 = vunpack.c.l.b16 %v79
    %v128 = vunpack.c.l.b16 %v80
    %v129 = vunpack.c.l.b16 %v81
    %v130 = vunpack.c.l.b16 %v82
    %v131 = vunpack.c.l.b16 %v83
    %v132 = vpack.c.b16 %v117, %v116
    %v133 = vpack.c.b16 %v119, %v118
    %v134 = vpack.c.b16 %v121, %v120
    %v135 = vpack.c.b16 %v123, %v122
    %v136 = vpack.c.b16 %v125, %v124
    %v137 = vpack.c.b16 %v127, %v126
    %v138 = vpack.c.b16 %v129, %v128
    %v139 = vpack.c.b16 %v131, %v130
    %v164 = vunpack.c.l.b16 %v84
    %v165 = vunpack.c.l.b16 %v85
    %v166 = vunpack.c.l.b16 %v86
    %v167 = vunpack.c.l.b16 %v87
    %v168 = vunpack.c.l.b16 %v88
    %v169 = vunpack.c.l.b16 %v89
    %v170 = vunpack.c.l.b16 %v90
    %v171 = vunpack.c.l.b16 %v91
    %v172 = vunpack.c.l.b16 %v92
    %v173 = vunpack.c.l.b16 %v93
    %v174 = vunpack.c.l.b16 %v94
    %v175 = vunpack.c.l.b16 %v95
    %v176 = vunpack.c.l.b16 %v96
    %v177 = vunpack.c.l.b16 %v97
    %v178 = vunpack.c.l.b16 %v98
    %v179 = vunpack.c.l.b16 %v99
    %v180 = vpack.c.b16 %v165, %v164
    %v181 = vpack.c.b16 %v167, %v166
    %v182 = vpack.c.b16 %v169, %v168
    %v183 = vpack.c.b16 %v171, %v170
    %v184 = vpack.c.b16 %v173, %v172
    %v185 = vpack.c.b16 %v175, %v174
    %v186 = vpack.c.b16 %v177, %v176
    %v187 = vpack.c.b16 %v179, %v178
    %196 = vmatprep.subr.bf16.mxu0 0
    %197 = vmatpush1.bf16.msra.mxu0 %v180
    %198 = vmatprep.subr.bf16.mxu0 0
    %199 = vmatpush1.bf16.msra.mxu0 %v181
    %200 = vmatprep.subr.bf16.mxu0 0
    %201 = vmatpush1.bf16.msra.mxu0 %v182
    %202 = vmatprep.subr.bf16.mxu0 0
    %203 = vmatpush1.bf16.msra.mxu0 %v183
    %204 = vmatprep.subr.bf16.mxu0 0
    %205 = vmatpush1.bf16.msra.mxu0 %v184
    %206 = vmatprep.subr.bf16.mxu0 0
    %207 = vmatpush1.bf16.msra.mxu0 %v185
    %208 = vmatprep.subr.bf16.mxu0 0
    %209 = vmatpush1.bf16.msra.mxu0 %v186
    %210 = vmatprep.subr.bf16.mxu0 0
    %211 = vmatpush1.bf16.msra.mxu0 %v187
    %212 = vmatprep.subr.bf16.mxu0 0
    %213 = vmatpush1.bf16.msra.mxu0 0
    %214 = vmatprep.subr.bf16.mxu0 0
    %215 = vmatpush1.bf16.msra.mxu0 0
    %216 = vmatprep.subr.bf16.mxu0 0
    %217 = vmatpush1.bf16.msra.mxu0 0
    %218 = vmatprep.subr.bf16.mxu0 0
    %219 = vmatpush1.bf16.msra.mxu0 0
    %220 = vmatprep.subr.bf16.mxu0 0
    %221 = vmatpush1.bf16.msra.mxu0 0
    %222 = vmatprep.subr.bf16.mxu0 0
    %223 = vmatpush1.bf16.msra.mxu0 0
    %224 = vmatprep.subr.bf16.mxu0 0
    %225 = vmatpush1.bf16.msra.mxu0 0
    %226 = vmatprep.subr.bf16.mxu0 0
    %227 = vmatpush1.bf16.msra.mxu0 0
    %228 = vmatprep.mubr.bf16.mxu0 0
    %229 = vmatmul.mubr.bf16.gmra.mrb[0].mxu0 %v132
    %v230 = vpop.f32.mrb[0].mxu0
    %v231 = vadd.f32 0.0, %v230
    %v232 = vpop.f32.mrb[0].mxu0
    %v233 = vpop.f32.mrb[0].mxu0
    %v234 = vadd.f32 0.0, %v233
    %v235 = vpop.f32.mrb[0].mxu0
    %236 = vmatprep.mubr.bf16.mxu0 0
    %237 = vmatmul.mubr.bf16.gmra.mrb[0].mxu0 %v133
    %v238 = vpop.f32.mrb[0].mxu0
    %v239 = vadd.f32 0.0, %v238
    %v240 = vpop.f32.mrb[0].mxu0
    %v241 = vpop.f32.mrb[0].mxu0
    %v242 = vadd.f32 0.0, %v241
    %v243 = vpop.f32.mrb[0].mxu0
    %244 = vmatprep.mubr.bf16.mxu0 0
    %245 = vmatmul.mubr.bf16.gmra.mrb[0].mxu0 %v134
    %v246 = vpop.f32.mrb[0].mxu0
    %v247 = vadd.f32 0.0, %v246
    %v248 = vpop.f32.mrb[0].mxu0
    %v249 = vpop.f32.mrb[0].mxu0
    %v250 = vadd.f32 0.0, %v249
    %v251 = vpop.f32.mrb[0].mxu0
    %252 = vmatprep.mubr.bf16.mxu0 0
    %253 = vmatmul.mubr.bf16.gmra.mrb[0].mxu0 %v135
    %v254 = vpop.f32.mrb[0].mxu0
    %v255 = vadd.f32 0.0, %v254
    %v256 = vpop.f32.mrb[0].mxu0
    %v257 = vpop.f32.mrb[0].mxu0
    %v258 = vadd.f32 0.0, %v257
    %v259 = vpop.f32.mrb[0].mxu0
    %260 = vmatprep.mubr.bf16.mxu0 0
    %261 = vmatmul.mubr.bf16.gmra.mrb[0].mxu0 %v136
    %v262 = vpop.f32.mrb[0].mxu0
    %v263 = vadd.f32 0.0, %v262
    %v264 = vpop.f32.mrb[0].mxu0
    %v265 = vpop.f32.mrb[0].mxu0
    %v266 = vadd.f32 0.0, %v265
    %v267 = vpop.f32.mrb[0].mxu0
    %268 = vmatprep.mubr.bf16.mxu0 0
    %269 = vmatmul.mubr.bf16.gmra.mrb[0].mxu0 %v137
    %v270 = vpop.f32.mrb[0].mxu0
    %v271 = vadd.f32 0.0, %v270
    %v272 = vpop.f32.mrb[0].mxu0
    %v273 = vpop.f32.mrb[0].mxu0
    %v274 = vadd.f32 0.0, %v273
    %v275 = vpop.f32.mrb[0].mxu0
    %276 = vmatprep.mubr.bf16.mxu0 0
    %277 = vmatmul.mubr.bf16.gmra.mrb[0].mxu0 %v138
    %v278 = vpop.f32.mrb[0].mxu0
    %v279 = vadd.f32 0.0, %v278
    %v280 = vpop.f32.mrb[0].mxu0
    %v281 = vpop.f32.mrb[0].mxu0
    %v282 = vadd.f32 0.0, %v281
    %v283 = vpop.f32.mrb[0].mxu0
    %284 = vmatprep.mubr.bf16.mxu0 0
    %285 = vmatmul.mubr.bf16.gmra.mrb[0].mxu0 %v139
    %v286 = vpop.f32.mrb[0].mxu0
    %v287 = vadd.f32 0.0, %v286
    %v288 = vpop.f32.mrb[0].mxu0
    %v289 = vpop.f32.mrb[0].mxu0
    %v290 = vadd.f32 0.0, %v289
    %v291 = vpop.f32.mrb[0].mxu0
    %292 = vdwg.mxu0
    %v293 = vpack.c.bf16 %v234, %v231
    %v294 = vpack.c.bf16 %v242, %v239
    %v295 = vpack.c.bf16 %v250, %v247
    %v296 = vpack.c.bf16 %v258, %v255
    %v297 = vpack.c.bf16 %v266, %v263
    %v298 = vpack.c.bf16 %v274, %v271
    %v299 = vpack.c.bf16 %v282, %v279
    %v300 = vpack.c.bf16 %v290, %v287
    %v301 = vld [vmem:[%s3] sm:$0x1]
    %v303 = vlaneseq
    %v304 = vshrl.u32 %v303, 7
    %v305 = vsub.s32 0, %v304
    %v306 = vrot.slane %v301, %v305
    %v324 = vunpack.c.l.b16 %v52
    %v325 = vunpack.c.l.b16 %v53
    %v326 = vunpack.c.l.b16 %v54
    %v327 = vunpack.c.l.b16 %v55
    %v328 = vunpack.c.l.b16 %v56
    %v329 = vunpack.c.l.b16 %v57
    %v330 = vunpack.c.l.b16 %v58
    %v331 = vunpack.c.l.b16 %v59
    %v332 = vunpack.c.l.b16 %v60
    %v333 = vunpack.c.l.b16 %v61
    %v334 = vunpack.c.l.b16 %v62
    %v335 = vunpack.c.l.b16 %v63
    %v336 = vunpack.c.l.b16 %v64
    %v337 = vunpack.c.l.b16 %v65
    %v338 = vunpack.c.l.b16 %v66
    %v339 = vunpack.c.l.b16 %v67
    %v340 = vpack.c.b16 %v325, %v324
    %v341 = vpack.c.b16 %v327, %v326
    %v342 = vpack.c.b16 %v329, %v328
    %v343 = vpack.c.b16 %v331, %v330
    %v344 = vpack.c.b16 %v333, %v332
    %v345 = vpack.c.b16 %v335, %v334
    %v346 = vpack.c.b16 %v337, %v336
    %v347 = vpack.c.b16 %v339, %v338
    %356 = vmatprep.subr.bf16.mxu0 0
    %357 = vmatpush1.bf16.msra.mxu0 %v293
    %358 = vmatprep.subr.bf16.mxu0 0
    %359 = vmatpush1.bf16.msra.mxu0 %v294
    %360 = vmatprep.subr.bf16.mxu0 0
    %361 = vmatpush1.bf16.msra.mxu0 %v295
    %362 = vmatprep.subr.bf16.mxu0 0
    %363 = vmatpush1.bf16.msra.mxu0 %v296
    %364 = vmatprep.subr.bf16.mxu0 0
    %365 = vmatpush1.bf16.msra.mxu0 %v297
    %366 = vmatprep.subr.bf16.mxu0 0
    %367 = vmatpush1.bf16.msra.mxu0 %v298
    %368 = vmatprep.subr.bf16.mxu0 0
    %369 = vmatpush1.bf16.msra.mxu0 %v299
    %370 = vmatprep.subr.bf16.mxu0 0
    %371 = vmatpush1.bf16.msra.mxu0 %v300
    %372 = vmatprep.subr.bf16.mxu0 0
    %373 = vmatpush1.bf16.msra.mxu0 0
    %374 = vmatprep.subr.bf16.mxu0 0
    %375 = vmatpush1.bf16.msra.mxu0 0
    %376 = vmatprep.subr.bf16.mxu0 0
    %377 = vmatpush1.bf16.msra.mxu0 0
    %378 = vmatprep.subr.bf16.mxu0 0
    %379 = vmatpush1.bf16.msra.mxu0 0
    %380 = vmatprep.subr.bf16.mxu0 0
    %381 = vmatpush1.bf16.msra.mxu0 0
    %382 = vmatprep.subr.bf16.mxu0 0
    %383 = vmatpush1.bf16.msra.mxu0 0
    %384 = vmatprep.subr.bf16.mxu0 0
    %385 = vmatpush1.bf16.msra.mxu0 0
    %386 = vmatprep.subr.bf16.mxu0 0
    %387 = vmatpush1.bf16.msra.mxu0 0
    %388 = vmatprep.mubr.bf16.mxu0 0
    %389 = vmatmul.mubr.bf16.gmra.mrb[0].mxu0 %v340
    %v390 = vpop.f32.mrb[0].mxu0
    %v391 = vadd.f32 %v306, %v390
    %v392 = vpop.f32.mrb[0].mxu0
    %v393 = vpop.f32.mrb[0].mxu0
    %v394 = vadd.f32 %v306, %v393
    %v395 = vpop.f32.mrb[0].mxu0
    %396 = vmatprep.mubr.bf16.mxu0 0
    %397 = vmatmul.mubr.bf16.gmra.mrb[0].mxu0 %v341
    %v398 = vpop.f32.mrb[0].mxu0
    %v399 = vadd.f32 %v306, %v398
    %v400 = vpop.f32.mrb[0].mxu0
    %v401 = vpop.f32.mrb[0].mxu0
    %v402 = vadd.f32 %v306, %v401
    %v403 = vpop.f32.mrb[0].mxu0
    %404 = vmatprep.mubr.bf16.mxu0 0
    %405 = vmatmul.mubr.bf16.gmra.mrb[0].mxu0 %v342
    %v406 = vpop.f32.mrb[0].mxu0
    %v407 = vadd.f32 %v306, %v406
    %v408 = vpop.f32.mrb[0].mxu0
    %v409 = vpop.f32.mrb[0].mxu0
    %v410 = vadd.f32 %v306, %v409
    %v411 = vpop.f32.mrb[0].mxu0
    %412 = vmatprep.mubr.bf16.mxu0 0
    %413 = vmatmul.mubr.bf16.gmra.mrb[0].mxu0 %v343
    %v414 = vpop.f32.mrb[0].mxu0
    %v415 = vadd.f32 %v306, %v414
    %v416 = vpop.f32.mrb[0].mxu0
    %v417 = vpop.f32.mrb[0].mxu0
    %v418 = vadd.f32 %v306, %v417
    %v419 = vpop.f32.mrb[0].mxu0
    %420 = vmatprep.mubr.bf16.mxu0 0
    %421 = vmatmul.mubr.bf16.gmra.mrb[0].mxu0 %v344
    %v422 = vpop.f32.mrb[0].mxu0
    %v423 = vadd.f32 %v306, %v422
    %v424 = vpop.f32.mrb[0].mxu0
    %v425 = vpop.f32.mrb[0].mxu0
    %v426 = vadd.f32 %v306, %v425
    %v427 = vpop.f32.mrb[0].mxu0
    %428 = vmatprep.mubr.bf16.mxu0 0
    %429 = vmatmul.mubr.bf16.gmra.mrb[0].mxu0 %v345
    %v430 = vpop.f32.mrb[0].mxu0
    %v431 = vadd.f32 %v306, %v430
    %v432 = vpop.f32.mrb[0].mxu0
    %v433 = vpop.f32.mrb[0].mxu0
    %v434 = vadd.f32 %v306, %v433
    %v435 = vpop.f32.mrb[0].mxu0
    %436 = vmatprep.mubr.bf16.mxu0 0
    %437 = vmatmul.mubr.bf16.gmra.mrb[0].mxu0 %v346
    %v438 = vpop.f32.mrb[0].mxu0
    %v439 = vadd.f32 %v306, %v438
    %v440 = vpop.f32.mrb[0].mxu0
    %v441 = vpop.f32.mrb[0].mxu0
    %v442 = vadd.f32 %v306, %v441
    %v443 = vpop.f32.mrb[0].mxu0
    %444 = vmatprep.mubr.bf16.mxu0 0
    %445 = vmatmul.mubr.bf16.gmra.mrb[0].mxu0 %v347
    %v446 = vpop.f32.mrb[0].mxu0
    %v447 = vadd.f32 %v306, %v446
    %v448 = vpop.f32.mrb[0].mxu0
    %v449 = vpop.f32.mrb[0].mxu0
    %v450 = vadd.f32 %v306, %v449
    %v451 = vpop.f32.mrb[0].mxu0
    %452 = vdwg.mxu0
    %v453 = vmax.f32 %v391, 0.0
    %v454 = vmax.f32 %v394, 0.0
    %v455 = vmax.f32 %v399, 0.0
    %v456 = vmax.f32 %v402, 0.0
    %v457 = vmax.f32 %v407, 0.0
    %v458 = vmax.f32 %v410, 0.0
    %v459 = vmax.f32 %v415, 0.0
    %v460 = vmax.f32 %v418, 0.0
    %v461 = vmax.f32 %v423, 0.0
    %v462 = vmax.f32 %v426, 0.0
    %v463 = vmax.f32 %v431, 0.0
    %v464 = vmax.f32 %v434, 0.0
    %v465 = vmax.f32 %v439, 0.0
    %v466 = vmax.f32 %v442, 0.0
    %v467 = vmax.f32 %v447, 0.0
    %v468 = vmax.f32 %v450, 0.0
    %v469 = vpack.c.bf16 %v454, %v453
    %v470 = vpack.c.bf16 %v456, %v455
    %v471 = vpack.c.bf16 %v458, %v457
    %v472 = vpack.c.bf16 %v460, %v459
    %v473 = vpack.c.bf16 %v462, %v461
    %v474 = vpack.c.bf16 %v464, %v463
    %v475 = vpack.c.bf16 %v466, %v465
    %v476 = vpack.c.bf16 %v468, %v467
    %v477 = vld [vmem:[%s4] sm:$0xf]
    %v478 = vld [vmem:[%s4 + $0x4] sm:$0xf]
    %v479 = vld [vmem:[%s4 + $0x8] sm:$0xf]
    %v480 = vld [vmem:[%s4 + $0xc] sm:$0xf]
    %v481 = vld [vmem:[%s4 + $0x10] sm:$0xf]
    %v482 = vld [vmem:[%s4 + $0x14] sm:$0xf]
    %v483 = vld [vmem:[%s4 + $0x18] sm:$0xf]
    %v484 = vld [vmem:[%s4 + $0x1c] sm:$0xf]
    %v485 = vld [vmem:[%s4 + $0x20] sm:$0xf]
    %v486 = vld [vmem:[%s4 + $0x24] sm:$0xf]
    %v487 = vld [vmem:[%s4 + $0x28] sm:$0xf]
    %v488 = vld [vmem:[%s4 + $0x2c] sm:$0xf]
    %v489 = vld [vmem:[%s4 + $0x30] sm:$0xf]
    %v490 = vld [vmem:[%s4 + $0x34] sm:$0xf]
    %v491 = vld [vmem:[%s4 + $0x38] sm:$0xf]
    %v492 = vld [vmem:[%s4 + $0x3c] sm:$0xf]
    %v509 = vunpack.c.l.b16 %v477
    %v510 = vunpack.c.l.b16 %v478
    %v511 = vunpack.c.l.b16 %v479
    %v512 = vunpack.c.l.b16 %v480
    %v513 = vunpack.c.l.b16 %v481
    %v514 = vunpack.c.l.b16 %v482
    %v515 = vunpack.c.l.b16 %v483
    %v516 = vunpack.c.l.b16 %v484
    %v517 = vunpack.c.l.b16 %v485
    %v518 = vunpack.c.l.b16 %v486
    %v519 = vunpack.c.l.b16 %v487
    %v520 = vunpack.c.l.b16 %v488
    %v521 = vunpack.c.l.b16 %v489
    %v522 = vunpack.c.l.b16 %v490
    %v523 = vunpack.c.l.b16 %v491
    %v524 = vunpack.c.l.b16 %v492
    %v525 = vpack.c.b16 %v510, %v509
    %v526 = vpack.c.b16 %v512, %v511
    %v527 = vpack.c.b16 %v514, %v513
    %v528 = vpack.c.b16 %v516, %v515
    %v529 = vpack.c.b16 %v518, %v517
    %v530 = vpack.c.b16 %v520, %v519
    %v531 = vpack.c.b16 %v522, %v521
    %v532 = vpack.c.b16 %v524, %v523
    %541 = vmatprep.subr.bf16.mxu0 0
    %542 = vmatpush1.bf16.msra.mxu0 %v525
    %543 = vmatprep.subr.bf16.mxu0 0
    %544 = vmatpush1.bf16.msra.mxu0 %v526
    %545 = vmatprep.subr.bf16.mxu0 0
    %546 = vmatpush1.bf16.msra.mxu0 %v527
    %547 = vmatprep.subr.bf16.mxu0 0
    %548 = vmatpush1.bf16.msra.mxu0 %v528
    %549 = vmatprep.subr.bf16.mxu0 0
    %550 = vmatpush1.bf16.msra.mxu0 %v529
    %551 = vmatprep.subr.bf16.mxu0 0
    %552 = vmatpush1.bf16.msra.mxu0 %v530
    %553 = vmatprep.subr.bf16.mxu0 0
    %554 = vmatpush1.bf16.msra.mxu0 %v531
    %555 = vmatprep.subr.bf16.mxu0 0
    %556 = vmatpush1.bf16.msra.mxu0 %v532
    %557 = vmatprep.subr.bf16.mxu0 0
    %558 = vmatpush1.bf16.msra.mxu0 0
    %559 = vmatprep.subr.bf16.mxu0 0
    %560 = vmatpush1.bf16.msra.mxu0 0
    %561 = vmatprep.subr.bf16.mxu0 0
    %562 = vmatpush1.bf16.msra.mxu0 0
    %563 = vmatprep.subr.bf16.mxu0 0
    %564 = vmatpush1.bf16.msra.mxu0 0
    %565 = vmatprep.subr.bf16.mxu0 0
    %566 = vmatpush1.bf16.msra.mxu0 0
    %567 = vmatprep.subr.bf16.mxu0 0
    %568 = vmatpush1.bf16.msra.mxu0 0
    %569 = vmatprep.subr.bf16.mxu0 0
    %570 = vmatpush1.bf16.msra.mxu0 0
    %571 = vmatprep.subr.bf16.mxu0 0
    %572 = vmatpush1.bf16.msra.mxu0 0
    %573 = vmatprep.mubr.bf16.mxu0 0
    %574 = vmatmul.mubr.bf16.gmra.mrb[0].mxu0 %v469
    %v575 = vpop.f32.mrb[0].mxu0
    %v576 = vadd.f32 0.0, %v575
    %v577 = vpop.f32.mrb[0].mxu0
    %v578 = vpop.f32.mrb[0].mxu0
    %v579 = vadd.f32 0.0, %v578
    %v580 = vpop.f32.mrb[0].mxu0
    %581 = vmatprep.mubr.bf16.mxu0 0
    %582 = vmatmul.mubr.bf16.gmra.mrb[0].mxu0 %v470
    %v583 = vpop.f32.mrb[0].mxu0
    %v584 = vadd.f32 0.0, %v583
    %v585 = vpop.f32.mrb[0].mxu0
    %v586 = vpop.f32.mrb[0].mxu0
    %v587 = vadd.f32 0.0, %v586
    %v588 = vpop.f32.mrb[0].mxu0
    %589 = vmatprep.mubr.bf16.mxu0 0
    %590 = vmatmul.mubr.bf16.gmra.mrb[0].mxu0 %v471
    %v591 = vpop.f32.mrb[0].mxu0
    %v592 = vadd.f32 0.0, %v591
    %v593 = vpop.f32.mrb[0].mxu0
    %v594 = vpop.f32.mrb[0].mxu0
    %v595 = vadd.f32 0.0, %v594
    %v596 = vpop.f32.mrb[0].mxu0
    %597 = vmatprep.mubr.bf16.mxu0 0
    %598 = vmatmul.mubr.bf16.gmra.mrb[0].mxu0 %v472
    %v599 = vpop.f32.mrb[0].mxu0
    %v600 = vadd.f32 0.0, %v599
    %v601 = vpop.f32.mrb[0].mxu0
    %v602 = vpop.f32.mrb[0].mxu0
    %v603 = vadd.f32 0.0, %v602
    %v604 = vpop.f32.mrb[0].mxu0
    %605 = vmatprep.mubr.bf16.mxu0 0
    %606 = vmatmul.mubr.bf16.gmra.mrb[0].mxu0 %v473
    %v607 = vpop.f32.mrb[0].mxu0
    %v608 = vadd.f32 0.0, %v607
    %v609 = vpop.f32.mrb[0].mxu0
    %v610 = vpop.f32.mrb[0].mxu0
    %v611 = vadd.f32 0.0, %v610
    %v612 = vpop.f32.mrb[0].mxu0
    %613 = vmatprep.mubr.bf16.mxu0 0
    %614 = vmatmul.mubr.bf16.gmra.mrb[0].mxu0 %v474
    %v615 = vpop.f32.mrb[0].mxu0
    %v616 = vadd.f32 0.0, %v615
    %v617 = vpop.f32.mrb[0].mxu0
    %v618 = vpop.f32.mrb[0].mxu0
    %v619 = vadd.f32 0.0, %v618
    %v620 = vpop.f32.mrb[0].mxu0
    %621 = vmatprep.mubr.bf16.mxu0 0
    %622 = vmatmul.mubr.bf16.gmra.mrb[0].mxu0 %v475
    %v623 = vpop.f32.mrb[0].mxu0
    %v624 = vadd.f32 0.0, %v623
    %v625 = vpop.f32.mrb[0].mxu0
    %v626 = vpop.f32.mrb[0].mxu0
    %v627 = vadd.f32 0.0, %v626
    %v628 = vpop.f32.mrb[0].mxu0
    %629 = vmatprep.mubr.bf16.mxu0 0
    %630 = vmatmul.mubr.bf16.gmra.mrb[0].mxu0 %v476
    %v631 = vpop.f32.mrb[0].mxu0
    %v632 = vadd.f32 0.0, %v631
    %v633 = vpop.f32.mrb[0].mxu0
    %v634 = vpop.f32.mrb[0].mxu0
    %v635 = vadd.f32 0.0, %v634
    %v636 = vpop.f32.mrb[0].mxu0
    %637 = vdwg.mxu0
    %v638 = vpack.c.bf16 %v579, %v576
    %v639 = vpack.c.bf16 %v587, %v584
    %v640 = vpack.c.bf16 %v595, %v592
    %v641 = vpack.c.bf16 %v603, %v600
    %v642 = vpack.c.bf16 %v611, %v608
    %v643 = vpack.c.bf16 %v619, %v616
    %v644 = vpack.c.bf16 %v627, %v624
    %v645 = vpack.c.bf16 %v635, %v632
    %v646 = vld [vmem:[%s5] sm:$0x1]
    %v648 = vlaneseq
    %v649 = vshrl.u32 %v648, 7
    %v650 = vsub.s32 0, %v649
    %v651 = vrot.slane %v646, %v650
    %653 = vmatprep.subr.bf16.mxu0 0
    %654 = vmatpush1.bf16.msra.mxu0 %v638
    %655 = vmatprep.subr.bf16.mxu0 0
    %656 = vmatpush1.bf16.msra.mxu0 %v639
    %657 = vmatprep.subr.bf16.mxu0 0
    %658 = vmatpush1.bf16.msra.mxu0 %v640
    %659 = vmatprep.subr.bf16.mxu0 0
    %660 = vmatpush1.bf16.msra.mxu0 %v641
    %661 = vmatprep.subr.bf16.mxu0 0
    %662 = vmatpush1.bf16.msra.mxu0 %v642
    %663 = vmatprep.subr.bf16.mxu0 0
    %664 = vmatpush1.bf16.msra.mxu0 %v643
    %665 = vmatprep.subr.bf16.mxu0 0
    %666 = vmatpush1.bf16.msra.mxu0 %v644
    %667 = vmatprep.subr.bf16.mxu0 0
    %668 = vmatpush1.bf16.msra.mxu0 %v645
    %669 = vmatprep.subr.bf16.mxu0 0
    %670 = vmatpush1.bf16.msra.mxu0 0
    %671 = vmatprep.subr.bf16.mxu0 0
    %672 = vmatpush1.bf16.msra.mxu0 0
    %673 = vmatprep.subr.bf16.mxu0 0
    %674 = vmatpush1.bf16.msra.mxu0 0
    %675 = vmatprep.subr.bf16.mxu0 0
    %676 = vmatpush1.bf16.msra.mxu0 0
    %677 = vmatprep.subr.bf16.mxu0 0
    %678 = vmatpush1.bf16.msra.mxu0 0
    %679 = vmatprep.subr.bf16.mxu0 0
    %680 = vmatpush1.bf16.msra.mxu0 0
    %681 = vmatprep.subr.bf16.mxu0 0
    %682 = vmatpush1.bf16.msra.mxu0 0
    %683 = vmatprep.subr.bf16.mxu0 0
    %684 = vmatpush1.bf16.msra.mxu0 0
    %685 = vmatprep.mubr.bf16.mxu0 0
    %686 = vmatmul.mubr.bf16.gmra.mrb[0].mxu0 %v340
    %v687 = vpop.f32.mrb[0].mxu0
    %v688 = vadd.f32 %v651, %v687
    %v689 = vpop.f32.mrb[0].mxu0
    %v690 = vpop.f32.mrb[0].mxu0
    %v691 = vadd.f32 %v651, %v690
    %v692 = vpop.f32.mrb[0].mxu0
    %693 = vmatprep.mubr.bf16.mxu0 0
    %694 = vmatmul.mubr.bf16.gmra.mrb[0].mxu0 %v341
    %v695 = vpop.f32.mrb[0].mxu0
    %v696 = vadd.f32 %v651, %v695
    %v697 = vpop.f32.mrb[0].mxu0
    %v698 = vpop.f32.mrb[0].mxu0
    %v699 = vadd.f32 %v651, %v698
    %v700 = vpop.f32.mrb[0].mxu0
    %701 = vmatprep.mubr.bf16.mxu0 0
    %702 = vmatmul.mubr.bf16.gmra.mrb[0].mxu0 %v342
    %v703 = vpop.f32.mrb[0].mxu0
    %v704 = vadd.f32 %v651, %v703
    %v705 = vpop.f32.mrb[0].mxu0
    %v706 = vpop.f32.mrb[0].mxu0
    %v707 = vadd.f32 %v651, %v706
    %v708 = vpop.f32.mrb[0].mxu0
    %709 = vmatprep.mubr.bf16.mxu0 0
    %710 = vmatmul.mubr.bf16.gmra.mrb[0].mxu0 %v343
    %v711 = vpop.f32.mrb[0].mxu0
    %v712 = vadd.f32 %v651, %v711
    %v713 = vpop.f32.mrb[0].mxu0
    %v714 = vpop.f32.mrb[0].mxu0
    %v715 = vadd.f32 %v651, %v714
    %v716 = vpop.f32.mrb[0].mxu0
    %717 = vmatprep.mubr.bf16.mxu0 0
    %718 = vmatmul.mubr.bf16.gmra.mrb[0].mxu0 %v344
    %v719 = vpop.f32.mrb[0].mxu0
    %v720 = vadd.f32 %v651, %v719
    %v721 = vpop.f32.mrb[0].mxu0
    %v722 = vpop.f32.mrb[0].mxu0
    %v723 = vadd.f32 %v651, %v722
    %v724 = vpop.f32.mrb[0].mxu0
    %725 = vmatprep.mubr.bf16.mxu0 0
    %726 = vmatmul.mubr.bf16.gmra.mrb[0].mxu0 %v345
    %v727 = vpop.f32.mrb[0].mxu0
    %v728 = vadd.f32 %v651, %v727
    %v729 = vpop.f32.mrb[0].mxu0
    %v730 = vpop.f32.mrb[0].mxu0
    %v731 = vadd.f32 %v651, %v730
    %v732 = vpop.f32.mrb[0].mxu0
    %733 = vmatprep.mubr.bf16.mxu0 0
    %734 = vmatmul.mubr.bf16.gmra.mrb[0].mxu0 %v346
    %v735 = vpop.f32.mrb[0].mxu0
    %v736 = vadd.f32 %v651, %v735
    %v737 = vpop.f32.mrb[0].mxu0
    %v738 = vpop.f32.mrb[0].mxu0
    %v739 = vadd.f32 %v651, %v738
    %v740 = vpop.f32.mrb[0].mxu0
    %741 = vmatprep.mubr.bf16.mxu0 0
    %742 = vmatmul.mubr.bf16.gmra.mrb[0].mxu0 %v347
    %v743 = vpop.f32.mrb[0].mxu0
    %v744 = vadd.f32 %v651, %v743
    %v745 = vpop.f32.mrb[0].mxu0
    %v746 = vpop.f32.mrb[0].mxu0
    %v747 = vadd.f32 %v651, %v746
    %v748 = vpop.f32.mrb[0].mxu0
    %749 = vdwg.mxu0
    %v750 = vlaneseq
    %v751 = vand.u32 %v750, 127
    %vm752 = vcmp.lt.s32.totalorder %v751, 24
    %v753 = vsel %vm752, %v688, -1e+30
    %v754 = vsel %vm752, %v691, -1e+30
    %v755 = vsel %vm752, %v696, -1e+30
    %v756 = vsel %vm752, %v699, -1e+30
    %v757 = vsel %vm752, %v704, -1e+30
    %v758 = vsel %vm752, %v707, -1e+30
    %v759 = vsel %vm752, %v712, -1e+30
    %v760 = vsel %vm752, %v715, -1e+30
    %v761 = vsel %vm752, %v720, -1e+30
    %v762 = vsel %vm752, %v723, -1e+30
    %v763 = vsel %vm752, %v728, -1e+30
    %v764 = vsel %vm752, %v731, -1e+30
    %v765 = vsel %vm752, %v736, -1e+30
    %v766 = vsel %vm752, %v739, -1e+30
    %v767 = vsel %vm752, %v744, -1e+30
    %v768 = vsel %vm752, %v747, -1e+30
    %769 = vmax.xlane.f32.xlu0 %v753
    %v770 = vpop.xlane.xlu0 %769
    %771 = vmax.xlane.f32.xlu0 %v754
    %v772 = vpop.xlane.xlu0 %771
    %773 = vmax.xlane.f32.xlu0 %v755
    %v774 = vpop.xlane.xlu0 %773
    %775 = vmax.xlane.f32.xlu0 %v756
    %v776 = vpop.xlane.xlu0 %775
    %777 = vmax.xlane.f32.xlu0 %v757
    %v778 = vpop.xlane.xlu0 %777
    %779 = vmax.xlane.f32.xlu0 %v758
    %v780 = vpop.xlane.xlu0 %779
    %781 = vmax.xlane.f32.xlu0 %v759
    %v782 = vpop.xlane.xlu0 %781
    %783 = vmax.xlane.f32.xlu0 %v760
    %v784 = vpop.xlane.xlu0 %783
    %785 = vmax.xlane.f32.xlu0 %v761
    %v786 = vpop.xlane.xlu0 %785
    %787 = vmax.xlane.f32.xlu0 %v762
    %v788 = vpop.xlane.xlu0 %787
    %789 = vmax.xlane.f32.xlu0 %v763
    %v790 = vpop.xlane.xlu0 %789
    %791 = vmax.xlane.f32.xlu0 %v764
    %v792 = vpop.xlane.xlu0 %791
    %793 = vmax.xlane.f32.xlu0 %v765
    %v794 = vpop.xlane.xlu0 %793
    %795 = vmax.xlane.f32.xlu0 %v766
    %v796 = vpop.xlane.xlu0 %795
    %797 = vmax.xlane.f32.xlu0 %v767
    %v798 = vpop.xlane.xlu0 %797
    %799 = vmax.xlane.f32.xlu0 %v768
    %v800 = vpop.xlane.xlu0 %799
    %v801 = vsub.f32 %v753, %v770
    %v802 = vsub.f32 %v754, %v772
    %v803 = vsub.f32 %v755, %v774
    %v804 = vsub.f32 %v756, %v776
    %v805 = vsub.f32 %v757, %v778
    %v806 = vsub.f32 %v758, %v780
    %v807 = vsub.f32 %v759, %v782
    %v808 = vsub.f32 %v760, %v784
    %v809 = vsub.f32 %v761, %v786
    %v810 = vsub.f32 %v762, %v788
    %v811 = vsub.f32 %v763, %v790
    %v812 = vsub.f32 %v764, %v792
    %v813 = vsub.f32 %v765, %v794
    %v814 = vsub.f32 %v766, %v796
    %v815 = vsub.f32 %v767, %v798
    %v816 = vsub.f32 %v768, %v800
    %v817 = vmul.f32 %v801, 1.442695
    %v818 = vpow.pop %v817
    %v819 = vmul.f32 %v802, 1.442695
    %v820 = vpow.pop %v819
    %v821 = vmul.f32 %v803, 1.442695
    %v822 = vpow.pop %v821
    %v823 = vmul.f32 %v804, 1.442695
    %v824 = vpow.pop %v823
    %v825 = vmul.f32 %v805, 1.442695
    %v826 = vpow.pop %v825
    %v827 = vmul.f32 %v806, 1.442695
    %v828 = vpow.pop %v827
    %v829 = vmul.f32 %v807, 1.442695
    %v830 = vpow.pop %v829
    %v831 = vmul.f32 %v808, 1.442695
    %v832 = vpow.pop %v831
    %v833 = vmul.f32 %v809, 1.442695
    %v834 = vpow.pop %v833
    %v835 = vmul.f32 %v810, 1.442695
    %v836 = vpow.pop %v835
    %v837 = vmul.f32 %v811, 1.442695
    %v838 = vpow.pop %v837
    %v839 = vmul.f32 %v812, 1.442695
    %v840 = vpow.pop %v839
    %v841 = vmul.f32 %v813, 1.442695
    %v842 = vpow.pop %v841
    %v843 = vmul.f32 %v814, 1.442695
    %v844 = vpow.pop %v843
    %v845 = vmul.f32 %v815, 1.442695
    %v846 = vpow.pop %v845
    %v847 = vmul.f32 %v816, 1.442695
    %v848 = vpow.pop %v847
    %849 = vadd.xlane.f32.xlu0 %v818
    %v850 = vpop.xlane.xlu0 %849
    %851 = vadd.xlane.f32.xlu0 %v820
    %v852 = vpop.xlane.xlu0 %851
    %853 = vadd.xlane.f32.xlu0 %v822
    %v854 = vpop.xlane.xlu0 %853
    %855 = vadd.xlane.f32.xlu0 %v824
    %v856 = vpop.xlane.xlu0 %855
    %857 = vadd.xlane.f32.xlu0 %v826
    %v858 = vpop.xlane.xlu0 %857
    %859 = vadd.xlane.f32.xlu0 %v828
    %v860 = vpop.xlane.xlu0 %859
    %861 = vadd.xlane.f32.xlu0 %v830
    %v862 = vpop.xlane.xlu0 %861
    %863 = vadd.xlane.f32.xlu0 %v832
    %v864 = vpop.xlane.xlu0 %863
    %865 = vadd.xlane.f32.xlu0 %v834
    %v866 = vpop.xlane.xlu0 %865
    %867 = vadd.xlane.f32.xlu0 %v836
    %v868 = vpop.xlane.xlu0 %867
    %869 = vadd.xlane.f32.xlu0 %v838
    %v870 = vpop.xlane.xlu0 %869
    %871 = vadd.xlane.f32.xlu0 %v840
    %v872 = vpop.xlane.xlu0 %871
    %873 = vadd.xlane.f32.xlu0 %v842
    %v874 = vpop.xlane.xlu0 %873
    %875 = vadd.xlane.f32.xlu0 %v844
    %v876 = vpop.xlane.xlu0 %875
    %877 = vadd.xlane.f32.xlu0 %v846
    %v878 = vpop.xlane.xlu0 %877
    %879 = vadd.xlane.f32.xlu0 %v848
    %v880 = vpop.xlane.xlu0 %879
    %v881 = vlog2.pop %v850
    %v882 = vmul.f32 %v881, 0.6931472
    %v883 = vlog2.pop %v852
    %v884 = vmul.f32 %v883, 0.6931472
    %v885 = vlog2.pop %v854
    %v886 = vmul.f32 %v885, 0.6931472
    %v887 = vlog2.pop %v856
    %v888 = vmul.f32 %v887, 0.6931472
    %v889 = vlog2.pop %v858
    %v890 = vmul.f32 %v889, 0.6931472
    %v891 = vlog2.pop %v860
    %v892 = vmul.f32 %v891, 0.6931472
    %v893 = vlog2.pop %v862
    %v894 = vmul.f32 %v893, 0.6931472
    %v895 = vlog2.pop %v864
    %v896 = vmul.f32 %v895, 0.6931472
    %v897 = vlog2.pop %v866
    %v898 = vmul.f32 %v897, 0.6931472
    %v899 = vlog2.pop %v868
    %v900 = vmul.f32 %v899, 0.6931472
    %v901 = vlog2.pop %v870
    %v902 = vmul.f32 %v901, 0.6931472
    %v903 = vlog2.pop %v872
    %v904 = vmul.f32 %v903, 0.6931472
    %v905 = vlog2.pop %v874
    %v906 = vmul.f32 %v905, 0.6931472
    %v907 = vlog2.pop %v876
    %v908 = vmul.f32 %v907, 0.6931472
    %v909 = vlog2.pop %v878
    %v910 = vmul.f32 %v909, 0.6931472
    %v911 = vlog2.pop %v880
    %v912 = vmul.f32 %v911, 0.6931472
    %v913 = vsub.f32 %v801, %v882
    %v914 = vsub.f32 %v802, %v884
    %v915 = vsub.f32 %v803, %v886
    %v916 = vsub.f32 %v804, %v888
    %v917 = vsub.f32 %v805, %v890
    %v918 = vsub.f32 %v806, %v892
    %v919 = vsub.f32 %v807, %v894
    %v920 = vsub.f32 %v808, %v896
    %v921 = vsub.f32 %v809, %v898
    %v922 = vsub.f32 %v810, %v900
    %v923 = vsub.f32 %v811, %v902
    %v924 = vsub.f32 %v812, %v904
    %v925 = vsub.f32 %v813, %v906
    %v926 = vsub.f32 %v814, %v908
    %v927 = vsub.f32 %v815, %v910
    %v928 = vsub.f32 %v816, %v912
    %929 = vst [vmem:[%s6] sm:$0xff] %v913
    %930 = vst [vmem:[%s6 + $0x8] sm:$0xff] %v914
    %931 = vst [vmem:[%s6 + $0x10] sm:$0xff] %v915
    %932 = vst [vmem:[%s6 + $0x18] sm:$0xff] %v916
    %933 = vst [vmem:[%s6 + $0x20] sm:$0xff] %v917
    %934 = vst [vmem:[%s6 + $0x28] sm:$0xff] %v918
    %935 = vst [vmem:[%s6 + $0x30] sm:$0xff] %v919
    %936 = vst [vmem:[%s6 + $0x38] sm:$0xff] %v920
    %937 = vst [vmem:[%s6 + $0x40] sm:$0xff] %v921
    %938 = vst [vmem:[%s6 + $0x48] sm:$0xff] %v922
    %939 = vst [vmem:[%s6 + $0x50] sm:$0xff] %v923
    %940 = vst [vmem:[%s6 + $0x58] sm:$0xff] %v924
    %941 = vst [vmem:[%s6 + $0x60] sm:$0xff] %v925
    %942 = vst [vmem:[%s6 + $0x68] sm:$0xff] %v926
    %943 = vst [vmem:[%s6 + $0x70] sm:$0xff] %v927
    %944 = vst [vmem:[%s6 + $0x78] sm:$0xff] %v928
    // Predicated region
    $region34: #{forward.1} parent=1 // pred_check
      _
    $region35: #{forward.1} parent=1 // pred_check_branch
      %946 = sbr.rel (0) target = $region37
    $region36: #{forward.1} parent=1 // pred_region
      _
    $region37: #{forward.1} parent=1 // pred_fallthru
      _
    // Predicated region
    $region38: #{forward.1} parent=1 // pred_check
      _
    $region39: #{forward.1} parent=1 // pred_check_branch
      %948 = sbr.rel (0) target = $region41
    $region40: #{forward.1} parent=1 // pred_region
      _
    $region41: #{forward.1} parent=1 // pred_fallthru
      _
    %949 = vsyncpa [#allocation3], 1
    %950 = vsyncpa [#allocation5], 1

</llo_original>
